<compile_context>
chip_gen: v6e
topology: v6e:2x2x1
jax: 0.10.0
libtpu: 0.0.40
codegen_flags: <defaults>
</compile_context>

<pallas_src>
import math

import jax
import jax.numpy as jnp
from jax.experimental import pallas as pl
from jax.experimental.pallas import tpu as pltpu


# ----------------------------- Pallas kernel --------------------------------

def dqn_kernel(x_ref, w1_ref, b1_ref, w2_ref, b2_ref,
               w3_ref, b3_ref, w4_ref, b4_ref, o_ref):
    # All four layers for one (TB, 10) batch tile. Feature dims are tiny, so
    # every intermediate lives comfortably in VMEM / vregs.
    x = x_ref[...].astype(jnp.bfloat16)
    h = jnp.dot(x, w1_ref[...], preferred_element_type=jnp.float32) + b1_ref[...]
    h = jnp.maximum(h, 0.0)
    h = jnp.dot(h.astype(jnp.bfloat16), w2_ref[...],
                preferred_element_type=jnp.float32) + b2_ref[...]
    h = jnp.maximum(h, 0.0)
    h = jnp.dot(h.astype(jnp.bfloat16), w3_ref[...],
                preferred_element_type=jnp.float32) + b3_ref[...]
    h = jnp.maximum(h, 0.0)
    h = jnp.dot(h.astype(jnp.bfloat16), w4_ref[...],
                preferred_element_type=jnp.float32) + b4_ref[...]
    o_ref[...] = h.astype(o_ref.dtype)


# ------------------------------- wrapper -------------------------------------

def dqn_forward(x, params, *, max_tb=1024):
    """x: (B, 10) float32. Returns (B, 9) float32 (== PyTorch out.view(-1, 9))."""
    (w1, b1), (w2, b2), (w3, b3), (w4, b4) = params
    B, F = x.shape
    assert F == 10, F

    # Pre-cast weights to bf16 once (MXU-native on v5e/v6e/v7x); biases stay f32.
    w1b, w2b, w3b, w4b = (w.astype(jnp.bfloat16) for w in (w1, w2, w3, w4))

    # Batch tile: multiple of 8 (f32 sublane packing), capped so the per-step
    # (TB, 500) f32 hidden stays ~2 MiB.
    TB = min(max_tb, max(8, ((B + 7) // 8) * 8))
    n_tiles = pl.cdiv(B, TB)
    B_pad = n_tiles * TB
    if B_pad != B:
        x = jnp.pad(x, ((0, B_pad - B), (0, 0)))

    def tile_spec(shape):          # batch-tiled arrays (x, out)
        return pl.BlockSpec(shape, lambda i: (i, 0))

    def const_spec(shape):         # VMEM-resident weights / biases
        return pl.BlockSpec(shape, lambda i: (0, 0))

    flops = 2 * B_pad * (10 * 50 + 50 * 500 + 500 * 90 + 90 * 9)
    weight_bytes = sum(int(w.size) * w.dtype.itemsize
                       for w in (w1b, w2b, w3b, w4b, b1, b2, b3, b4))
    bytes_accessed = B_pad * (10 + 9) * 4 + weight_bytes

    out = pl.pallas_call(
        dqn_kernel,
        out_shape=jax.ShapeDtypeStruct((B_pad, 9), jnp.float32),
        grid=(n_tiles,),
        in_specs=[tile_spec((TB, 10)),
                  const_spec(w1b.shape), const_spec(b1.shape),
                  const_spec(w2b.shape), const_spec(b2.shape),
                  const_spec(w3b.shape), const_spec(b3.shape),
                  const_spec(w4b.shape), const_spec(b4.shape)],
        out_specs=tile_spec((TB, 9)),
        compiler_params=pltpu.CompilerParams(
            dimension_semantics=("parallel",),        # megacore sharding on v7x
            vmem_limit_bytes=64 * 1024 * 1024),
        cost_estimate=pl.CostEstimate(
            flops=flops, bytes_accessed=bytes_accessed, transcendentals=0),
    )(x, w1b, b1, w2b, b2, w3b, b3, w4b, b4)

    # Drop batch padding; mirror PyTorch's `out.view(-1, 9)`.
    return out[:B].reshape(-1, 9)


# --------------------------- parameter init ----------------------------------

def init_linear(key, fan_in, fan_out):
    """PyTorch nn.Linear default init: U(-1/sqrt(fan_in), 1/sqrt(fan_in))."""
    kw, kb = jax.random.split(key)
    bound = 1.0 / math.sqrt(fan_in)
    # weight stored as (in, out) — i.e. already transposed for x @ W.
    w = jax.random.uniform(kw, (fan_in, fan_out), jnp.float32, -bound, bound)
    b = jax.random.uniform(kb, (1, fan_out), jnp.float32, -bound, bound)
    return w, b


def init_dqn_params(key):
    k1, k2, k3, k4 = jax.random.split(key, 4)
    return (init_linear(k1, 10, 50),
            init_linear(k2, 50, 500),
            init_linear(k3, 500, 90),
            init_linear(k4, 90, 9))


# ------------------------------ references -----------------------------------

def dqn_reference_f32(x, params):
    (w1, b1), (w2, b2), (w3, b3), (w4, b4) = params
    h = jnp.maximum(x @ w1 + b1, 0.0)
    h = jnp.maximum(h @ w2 + b2, 0.0)
    h = jnp.maximum(h @ w3 + b3, 0.0)
    h = h @ w4 + b4
    return h.reshape(-1, 9)


def dqn_reference_bf16(x, params):
    """Matches the kernel's numerics: bf16 matmul inputs, f32 accumulation."""
    bf = jnp.bfloat16
    (w1, b1), (w2, b2), (w3, b3), (w4, b4) = params
    h = x
    for w, b, relu in ((w1, b1, True), (w2, b2, True), (w3, b3, True), (w4, b4, False)):
        h = jnp.dot(h.astype(bf), w.astype(bf),
                    preferred_element_type=jnp.float32) + b
        if relu:
            h = jnp.maximum(h, 0.0)
    return h.reshape(-1, 9)


# --------------------------------- main ---------------------------------------

if __name__ == "__main__":
    key = jax.random.PRNGKey(0)
    k_params, k_x1, k_x2 = jax.random.split(key, 3)

    params = init_dqn_params(k_params)

    # Test 1: tiny batch (single grid step).
    B1 = 8
    x1 = jax.random.normal(k_x1, (B1, 10), jnp.float32)
    out1 = jax.block_until_ready(dqn_forward(x1, params))
    assert out1.shape == (B1, 9), out1.shape
    assert jnp.allclose(out1, dqn_reference_bf16(x1, params), atol=1e-2, rtol=1e-2)
    assert jnp.allclose(out1, dqn_reference_f32(x1, params), atol=5e-2, rtol=5e-2)

    # Test 2: non-multiple batch with a small tile -> exercises padding and a
    # multi-step pipelined grid with VMEM-resident weights.
    B2 = 200
    x2 = jax.random.normal(k_x2, (B2, 10), jnp.float32)
    out2 = jax.block_until_ready(dqn_forward(x2, params, max_tb=64))
    assert out2.shape == (B2, 9), out2.shape
    assert jnp.allclose(out2, dqn_reference_bf16(x2, params), atol=1e-2, rtol=1e-2)
    assert jnp.allclose(out2, dqn_reference_f32(x2, params), atol=5e-2, rtol=5e-2)

    print("KERNEL_OK")
</pallas_src>

<mosaic_0001>
module attributes {stable_mosaic.version = 11 : i64} {
  func.func @dqn_kernel(%arg0: i32, %arg1: memref<8x10xf32, #tpu.memory_space<vmem>>, %arg2: memref<10x50xbf16, #tpu.memory_space<vmem>>, %arg3: memref<1x50xf32, #tpu.memory_space<vmem>>, %arg4: memref<50x500xbf16, #tpu.memory_space<vmem>>, %arg5: memref<1x500xf32, #tpu.memory_space<vmem>>, %arg6: memref<500x90xbf16, #tpu.memory_space<vmem>>, %arg7: memref<1x90xf32, #tpu.memory_space<vmem>>, %arg8: memref<90x9xbf16, #tpu.memory_space<vmem>>, %arg9: memref<1x9xf32, #tpu.memory_space<vmem>>, %arg10: memref<8x9xf32, #tpu.memory_space<vmem>>) attributes {dimension_semantics = [#tpu.dimension_semantics<parallel>], iteration_bounds = array<i64: 1>, scalar_prefetch = 0 : i64, scratch_operands = 0 : i64, tpu.core_type = #tpu.core_type<tc>, window_params = [{transform_indices = @transform_0, window_bounds = array<i64: 8, 10>}, {pipeline_mode = #tpu.pipeline_mode<synchronous>, transform_indices = @transform_1, window_bounds = array<i64: 10, 50>}, {pipeline_mode = #tpu.pipeline_mode<synchronous>, transform_indices = @transform_2, window_bounds = array<i64: 1, 50>}, {pipeline_mode = #tpu.pipeline_mode<synchronous>, transform_indices = @transform_3, window_bounds = array<i64: 50, 500>}, {pipeline_mode = #tpu.pipeline_mode<synchronous>, transform_indices = @transform_4, window_bounds = array<i64: 1, 500>}, {pipeline_mode = #tpu.pipeline_mode<synchronous>, transform_indices = @transform_5, window_bounds = array<i64: 500, 90>}, {pipeline_mode = #tpu.pipeline_mode<synchronous>, transform_indices = @transform_6, window_bounds = array<i64: 1, 90>}, {pipeline_mode = #tpu.pipeline_mode<synchronous>, transform_indices = @transform_7, window_bounds = array<i64: 90, 9>}, {pipeline_mode = #tpu.pipeline_mode<synchronous>, transform_indices = @transform_8, window_bounds = array<i64: 1, 9>}, {transform_indices = @transform_9, window_bounds = array<i64: 8, 9>}]} {
    %c0 = arith.constant 0 : index
    %c0_0 = arith.constant 0 : index
    %0 = vector.load %arg1[%c0, %c0_0] : memref<8x10xf32, #tpu.memory_space<vmem>>, vector<8x10xf32>
    %1 = arith.truncf %0 : vector<8x10xf32> to vector<8x10xbf16>
    %c0_1 = arith.constant 0 : index
    %c0_2 = arith.constant 0 : index
    %2 = vector.load %arg2[%c0_1, %c0_2] : memref<10x50xbf16, #tpu.memory_space<vmem>>, vector<10x50xbf16>
    %cst = arith.constant dense<0.000000e+00> : vector<8x50xf32>
    %3 = tpu.matmul %1, %2, %cst {dimension_numbers = #tpu.dot_dimension_numbers<[1], [0], [0], [1], [0, 0, 1, 1], [], []>} : vector<8x10xbf16>, vector<10x50xbf16>, vector<8x50xf32> -> vector<8x50xf32>
    %c0_3 = arith.constant 0 : index
    %c0_4 = arith.constant 0 : index
    %4 = vector.load %arg3[%c0_3, %c0_4] : memref<1x50xf32, #tpu.memory_space<vmem>>, vector<1x50xf32>
    %5 = vector.broadcast %4 : vector<1x50xf32> to vector<8x50xf32>
    %6 = arith.addf %3, %5 : vector<8x50xf32>
    %cst_5 = arith.constant 0.000000e+00 : f32
    %7 = vector.broadcast %cst_5 : f32 to vector<8x50xf32>
    %8 = arith.maximumf %6, %7 : vector<8x50xf32>
    %9 = arith.truncf %8 : vector<8x50xf32> to vector<8x50xbf16>
    %c0_6 = arith.constant 0 : index
    %c0_7 = arith.constant 0 : index
    %10 = vector.load %arg4[%c0_6, %c0_7] : memref<50x500xbf16, #tpu.memory_space<vmem>>, vector<50x500xbf16>
    %cst_8 = arith.constant dense<0.000000e+00> : vector<8x500xf32>
    %11 = tpu.matmul %9, %10, %cst_8 {dimension_numbers = #tpu.dot_dimension_numbers<[1], [0], [0], [1], [0, 0, 1, 1], [], []>} : vector<8x50xbf16>, vector<50x500xbf16>, vector<8x500xf32> -> vector<8x500xf32>
    %c0_9 = arith.constant 0 : index
    %c0_10 = arith.constant 0 : index
    %12 = vector.load %arg5[%c0_9, %c0_10] : memref<1x500xf32, #tpu.memory_space<vmem>>, vector<1x500xf32>
    %13 = vector.broadcast %12 : vector<1x500xf32> to vector<8x500xf32>
    %14 = arith.addf %11, %13 : vector<8x500xf32>
    %cst_11 = arith.constant 0.000000e+00 : f32
    %15 = vector.broadcast %cst_11 : f32 to vector<8x500xf32>
    %16 = arith.maximumf %14, %15 : vector<8x500xf32>
    %17 = arith.truncf %16 : vector<8x500xf32> to vector<8x500xbf16>
    %c0_12 = arith.constant 0 : index
    %c0_13 = arith.constant 0 : index
    %18 = vector.load %arg6[%c0_12, %c0_13] : memref<500x90xbf16, #tpu.memory_space<vmem>>, vector<500x90xbf16>
    %cst_14 = arith.constant dense<0.000000e+00> : vector<8x90xf32>
    %19 = tpu.matmul %17, %18, %cst_14 {dimension_numbers = #tpu.dot_dimension_numbers<[1], [0], [0], [1], [0, 0, 1, 1], [], []>} : vector<8x500xbf16>, vector<500x90xbf16>, vector<8x90xf32> -> vector<8x90xf32>
    %c0_15 = arith.constant 0 : index
    %c0_16 = arith.constant 0 : index
    %20 = vector.load %arg7[%c0_15, %c0_16] : memref<1x90xf32, #tpu.memory_space<vmem>>, vector<1x90xf32>
    %21 = vector.broadcast %20 : vector<1x90xf32> to vector<8x90xf32>
    %22 = arith.addf %19, %21 : vector<8x90xf32>
    %cst_17 = arith.constant 0.000000e+00 : f32
    %23 = vector.broadcast %cst_17 : f32 to vector<8x90xf32>
    %24 = arith.maximumf %22, %23 : vector<8x90xf32>
    %25 = arith.truncf %24 : vector<8x90xf32> to vector<8x90xbf16>
    %c0_18 = arith.constant 0 : index
    %c0_19 = arith.constant 0 : index
    %26 = vector.load %arg8[%c0_18, %c0_19] : memref<90x9xbf16, #tpu.memory_space<vmem>>, vector<90x9xbf16>
    %cst_20 = arith.constant dense<0.000000e+00> : vector<8x9xf32>
    %27 = tpu.matmul %25, %26, %cst_20 {dimension_numbers = #tpu.dot_dimension_numbers<[1], [0], [0], [1], [0, 0, 1, 1], [], []>} : vector<8x90xbf16>, vector<90x9xbf16>, vector<8x9xf32> -> vector<8x9xf32>
    %c0_21 = arith.constant 0 : index
    %c0_22 = arith.constant 0 : index
    %28 = vector.load %arg9[%c0_21, %c0_22] : memref<1x9xf32, #tpu.memory_space<vmem>>, vector<1x9xf32>
    %29 = vector.broadcast %28 : vector<1x9xf32> to vector<8x9xf32>
    %30 = arith.addf %27, %29 : vector<8x9xf32>
    %c0_23 = arith.constant 0 : index
    %c0_24 = arith.constant 0 : index
    %31 = vector.load %arg10[%c0_23, %c0_24] : memref<8x9xf32, #tpu.memory_space<vmem>>, vector<8x9xf32>
    tpu.vector_store %arg10[%c0_23, %c0_24], %30 {strides = array<i32>} : memref<8x9xf32, #tpu.memory_space<vmem>>, vector<8x9xf32>,
    return
  }
  func.func @transform_0(%arg0: i32) -> (i32, i32) {
    %c0_i32 = arith.constant 0 : i32
    %c0_i32_0 = arith.constant 0 : i32
    return %arg0, %c0_i32 : i32, i32
  }
  func.func @transform_1(%arg0: i32) -> (i32, i32) {
    %c0_i32 = arith.constant 0 : i32
    %c0_i32_0 = arith.constant 0 : i32
    %c0_i32_1 = arith.constant 0 : i32
    return %c0_i32, %c0_i32_0 : i32, i32
  }
  func.func @transform_2(%arg0: i32) -> (i32, i32) {
    %c0_i32 = arith.constant 0 : i32
    %c0_i32_0 = arith.constant 0 : i32
    %c0_i32_1 = arith.constant 0 : i32
    return %c0_i32, %c0_i32_0 : i32, i32
  }
  func.func @transform_3(%arg0: i32) -> (i32, i32) {
    %c0_i32 = arith.constant 0 : i32
    %c0_i32_0 = arith.constant 0 : i32
    %c0_i32_1 = arith.constant 0 : i32
    return %c0_i32, %c0_i32_0 : i32, i32
  }
  func.func @transform_4(%arg0: i32) -> (i32, i32) {
    %c0_i32 = arith.constant 0 : i32
    %c0_i32_0 = arith.constant 0 : i32
    %c0_i32_1 = arith.constant 0 : i32
    return %c0_i32, %c0_i32_0 : i32, i32
  }
  func.func @transform_5(%arg0: i32) -> (i32, i32) {
    %c0_i32 = arith.constant 0 : i32
    %c0_i32_0 = arith.constant 0 : i32
    %c0_i32_1 = arith.constant 0 : i32
    return %c0_i32, %c0_i32_0 : i32, i32
  }
  func.func @transform_6(%arg0: i32) -> (i32, i32) {
    %c0_i32 = arith.constant 0 : i32
    %c0_i32_0 = arith.constant 0 : i32
    %c0_i32_1 = arith.constant 0 : i32
    return %c0_i32, %c0_i32_0 : i32, i32
  }
  func.func @transform_7(%arg0: i32) -> (i32, i32) {
    %c0_i32 = arith.constant 0 : i32
    %c0_i32_0 = arith.constant 0 : i32
    %c0_i32_1 = arith.constant 0 : i32
    return %c0_i32, %c0_i32_0 : i32, i32
  }
  func.func @transform_8(%arg0: i32) -> (i32, i32) {
    %c0_i32 = arith.constant 0 : i32
    %c0_i32_0 = arith.constant 0 : i32
    %c0_i32_1 = arith.constant 0 : i32
    return %c0_i32, %c0_i32_0 : i32, i32
  }
  func.func @transform_9(%arg0: i32) -> (i32, i32) {
    %c0_i32 = arith.constant 0 : i32
    %c0_i32_0 = arith.constant 0 : i32
    return %arg0, %c0_i32 : i32, i32
  }
}

</mosaic_0001>

<llo_original>
// kernel: tpu_custom_call.1
$region0: #{tpu_custom_call.1}
  #allocation0 [shape = 'u32[]', space=smem, size = 0x4, offset = 0x4, fixed_abs, tag = 'smem constant byte address 0x4 - core index']
  #allocation1 [shape = 'u32[144,128]{1,0:T(1,128)}', space=vmem, size = 0x12000, scoped, tag = 'internal scratch']
  %s0 = inlined_call_operand.vmem [shape: f32[8,10], index: 0, kind: input, shape index: {}]
  %s1 = inlined_call_operand.vmem [shape: bf16[10,50], index: 1, kind: input, shape index: {}]
  %s2 = inlined_call_operand.vmem [shape: f32[1,50], index: 2, kind: input, shape index: {}]
  %s3 = inlined_call_operand.vmem [shape: bf16[50,500], index: 3, kind: input, shape index: {}]
  %s4 = inlined_call_operand.vmem [shape: f32[1,500], index: 4, kind: input, shape index: {}]
  %s5 = inlined_call_operand.vmem [shape: bf16[500,90], index: 5, kind: input, shape index: {}]
  %s6 = inlined_call_operand.vmem [shape: f32[1,90], index: 6, kind: input, shape index: {}]
  %s7 = inlined_call_operand.vmem [shape: bf16[90,9], index: 7, kind: input, shape index: {}]
  %s8 = inlined_call_operand.vmem [shape: f32[1,9], index: 8, kind: input, shape index: {}]
  %s9 = inlined_call_operand.hbm [shape: f32[8,9], index: 9, kind: output, shape index: {}]
  %s10 = sld [smem:[#allocation0]]
  $region46: #{tpu_custom_call.1} parent=0
    _
  %s12 = ssub.s32 1, %s10
  %s13 = scalar_select 0, %s12, %s10
  $region1: #{tpu_custom_call.1} parent=0
    #allocation2 [shape = 'u8[4096]{0}', space=vmem, size = 0x1000, scoped, tag = 'output window, operand 0, single buffered']
    #allocation3 [shape = 's32[1]{0}', space=sflag, size = 0x4, scoped, tag = 'scoped memory for tpu_custom_call.1']
    %14 = vsyncpa [#allocation3], 0
    // Predicated region
    $region2: #{tpu_custom_call.1} parent=1 // pred_check
      _
    $region3: #{tpu_custom_call.1} parent=1 // pred_check_branch
      %16 = sbr.rel (0) target = $region5
    $region4: #{tpu_custom_call.1} parent=1 // pred_region
      _
    $region5: #{tpu_custom_call.1} parent=1 // pred_fallthru
      _
    // Predicated region
    $region6: #{tpu_custom_call.1} parent=1 // pred_check
      _
    $region7: #{tpu_custom_call.1} parent=1 // pred_check_branch
      %18 = sbr.rel (0) target = $region9
    $region8: #{tpu_custom_call.1} parent=1 // pred_region
      _
    $region9: #{tpu_custom_call.1} parent=1 // pred_fallthru
      _
    // Predicated region
    $region10: #{tpu_custom_call.1} parent=1 // pred_check
      _
    $region11: #{tpu_custom_call.1} parent=1 // pred_check_branch
      %20 = sbr.rel (0) target = $region13
    $region12: #{tpu_custom_call.1} parent=1 // pred_region
      _
    $region13: #{tpu_custom_call.1} parent=1 // pred_fallthru
      _
    // Predicated region
    $region14: #{tpu_custom_call.1} parent=1 // pred_check
      _
    $region15: #{tpu_custom_call.1} parent=1 // pred_check_branch
      %22 = sbr.rel (0) target = $region17
    $region16: #{tpu_custom_call.1} parent=1 // pred_region
      _
    $region17: #{tpu_custom_call.1} parent=1 // pred_fallthru
      _
    // Predicated region
    $region18: #{tpu_custom_call.1} parent=1 // pred_check
      _
    $region19: #{tpu_custom_call.1} parent=1 // pred_check_branch
      %24 = sbr.rel (0) target = $region21
    $region20: #{tpu_custom_call.1} parent=1 // pred_region
      _
    $region21: #{tpu_custom_call.1} parent=1 // pred_fallthru
      _
    // Predicated region
    $region22: #{tpu_custom_call.1} parent=1 // pred_check
      _
    $region23: #{tpu_custom_call.1} parent=1 // pred_check_branch
      %26 = sbr.rel (0) target = $region25
    $region24: #{tpu_custom_call.1} parent=1 // pred_region
      _
    $region25: #{tpu_custom_call.1} parent=1 // pred_fallthru
      _
    // Predicated region
    $region26: #{tpu_custom_call.1} parent=1 // pred_check
      _
    $region27: #{tpu_custom_call.1} parent=1 // pred_check_branch
      %28 = sbr.rel (0) target = $region29
    $region28: #{tpu_custom_call.1} parent=1 // pred_region
      _
    $region29: #{tpu_custom_call.1} parent=1 // pred_fallthru
      _
    // Predicated region
    $region30: #{tpu_custom_call.1} parent=1 // pred_check
      _
    $region31: #{tpu_custom_call.1} parent=1 // pred_check_branch
      %30 = sbr.rel (0) target = $region33
    $region32: #{tpu_custom_call.1} parent=1 // pred_region
      _
    $region33: #{tpu_custom_call.1} parent=1 // pred_fallthru
      _
    // Predicated region
    $region34: #{tpu_custom_call.1} parent=1 // pred_check
      _
    $region35: #{tpu_custom_call.1} parent=1 // pred_check_branch
      %32 = sbr.rel (0) target = $region37
    $region36: #{tpu_custom_call.1} parent=1 // pred_region
      _
    $region37: #{tpu_custom_call.1} parent=1 // pred_fallthru
      _
    %v34 = vld [vmem:[%s0] sm:$0xff]
    %v35 = vpack.c.bf16 %v34, %v34
    %v36 = vld [vmem:[%s1] sm:$0xf]
    %v37 = vld [vmem:[%s1 + $0x4] sm:$0x1]
    %v38 = vld [vmem:[%s2] sm:$0x1]
    %v40 = vlaneseq
    %v41 = vshrl.u32 %v40, 7
    %v42 = vsub.s32 0, %v41
    %v43 = vrot.slane %v38, %v42
    %v47 = vunpack.c.l.b16 %v36
    %v48 = vunpack.c.l.b16 %v37
    %v49 = vpack.c.b16 %v48, %v47
    %vm50 = vcmask 80896
    %v52 = vsel %vm50, %v35, 0
    %vm54 = vcmask 1044480
    %v56 = vsel %vm54, %v49, 0
    %58 = vmatprep.subr.bf16.mxu0 0
    %59 = vmatpush1.bf16.msra.mxu0 0
    %60 = vmatprep.subr.bf16.mxu0 0
    %61 = vmatpush1.bf16.msra.mxu0 0
    %62 = vmatprep.subr.bf16.mxu0 0
    %63 = vmatpush1.bf16.msra.mxu0 0
    %64 = vmatprep.subr.bf16.mxu0 0
    %65 = vmatpush1.bf16.msra.mxu0 0
    %66 = vmatprep.subr.bf16.mxu0 0
    %67 = vmatpush1.bf16.msra.mxu0 0
    %68 = vmatprep.subr.bf16.mxu0 0
    %69 = vmatpush1.bf16.msra.mxu0 0
    %70 = vmatprep.subr.bf16.mxu0 0
    %71 = vmatpush1.bf16.msra.mxu0 0
    %72 = vmatprep.subr.bf16.mxu0 0
    %73 = vmatpush1.bf16.msra.mxu0 %v56
    %74 = vmatprep.subr.bf16.mxu0 0
    %75 = vmatpush2.bf16.msra.mxu0 0
    %76 = vmatprep.subr.bf16.mxu0 0
    %77 = vmatpush2.bf16.msra.mxu0 0
    %78 = vmatprep.subr.bf16.mxu0 0
    %79 = vmatpush2.bf16.msra.mxu0 0
    %80 = vmatprep.subr.bf16.mxu0 0
    %81 = vmatpush2.bf16.msra.mxu0 0
    %82 = vmatprep.subr.bf16.mxu0 0
    %83 = vmatpush2.bf16.msra.mxu0 0
    %84 = vmatprep.subr.bf16.mxu0 0
    %85 = vmatpush2.bf16.msra.mxu0 0
    %86 = vmatprep.subr.bf16.mxu0 0
    %87 = vmatpush2.bf16.msra.mxu0 0
    %88 = vmatprep.subr.bf16.mxu0 0
    %89 = vmatpush2.bf16.msra.mxu0 0
    %90 = vmatprep.mubr.bf16.mxu0 0
    %91 = vmatmul.mubr.bf16.gmra.mxu0 %v52
    %v92 = vpop.f32.mrf.mxu0
    %v93 = vadd.f32 %v43, %v92
    %v94 = vpop.f32.mrf.mxu0
    %v95 = vpop.f32.mrf.mxu0
    %v96 = vpop.f32.mrf.mxu0
    %97 = vdwg.mxu0
    %v98 = vmax.f32 %v93, 0.0
    %v99 = vpack.c.bf16 %v98, %v98
    %v100 = vld [vmem:[%s3] sm:$0xff]
    %v101 = vld [vmem:[%s3 + $0x8] sm:$0xff]
    %v102 = vld [vmem:[%s3 + $0x10] sm:$0xff]
    %v103 = vld [vmem:[%s3 + $0x18] sm:$0xff]
    %v104 = vld [vmem:[%s3 + $0x20] sm:$0xff]
    %v105 = vld [vmem:[%s3 + $0x28] sm:$0xff]
    %v106 = vld [vmem:[%s3 + $0x30] sm:$0xff]
    %v107 = vld [vmem:[%s3 + $0x38] sm:$0xff]
    %v108 = vld [vmem:[%s3 + $0x40] sm:$0xff]
    %v109 = vld [vmem:[%s3 + $0x48] sm:$0xff]
    %v110 = vld [vmem:[%s3 + $0x50] sm:$0xff]
    %v111 = vld [vmem:[%s3 + $0x58] sm:$0xff]
    %v112 = vld [vmem:[%s3 + $0x60] sm:$0x11]
    %v113 = vld [vmem:[%s3 + $0x68] sm:$0x11]
    %v114 = vld [vmem:[%s4] sm:$0xf]
    %v116 = vlaneseq
    %v117 = vshrl.u32 %v116, 7
    %v118 = vsub.s32 0, %v117
    %v119 = vrot.slane %v114, %v118
    %v120 = vlaneseq
    %v121 = vshrl.u32 %v120, 7
    %v122 = vsub.s32 1, %v121
    %v123 = vrot.slane %v114, %v122
    %v124 = vlaneseq
    %v125 = vshrl.u32 %v124, 7
    %v126 = vsub.s32 2, %v125
    %v127 = vrot.slane %v114, %v126
    %v128 = vlaneseq
    %v129 = vshrl.u32 %v128, 7
    %v130 = vsub.s32 3, %v129
    %v131 = vrot.slane %v114, %v130
    %v150 = vunpack.c.l.b16 %v100
    %v151 = vunpack.c.h.b16 %v100
    %v152 = vunpack.c.l.b16 %v101
    %v153 = vunpack.c.h.b16 %v101
    %v154 = vunpack.c.l.b16 %v102
    %v155 = vunpack.c.h.b16 %v102
    %v156 = vunpack.c.l.b16 %v103
    %v157 = vunpack.c.h.b16 %v103
    %v158 = vunpack.c.l.b16 %v104
    %v159 = vunpack.c.h.b16 %v104
    %v160 = vunpack.c.l.b16 %v105
    %v161 = vunpack.c.h.b16 %v105
    %v162 = vunpack.c.l.b16 %v106
    %v163 = vunpack.c.h.b16 %v106
    %v164 = vunpack.c.l.b16 %v107
    %v165 = vunpack.c.h.b16 %v107
    %v166 = vunpack.c.l.b16 %v108
    %v167 = vunpack.c.h.b16 %v108
    %v168 = vunpack.c.l.b16 %v109
    %v169 = vunpack.c.h.b16 %v109
    %v170 = vunpack.c.l.b16 %v110
    %v171 = vunpack.c.h.b16 %v110
    %v172 = vunpack.c.l.b16 %v111
    %v173 = vunpack.c.h.b16 %v111
    %v174 = vunpack.c.l.b16 %v112
    %v175 = vunpack.c.h.b16 %v112
    %v176 = vunpack.c.l.b16 %v113
    %v177 = vunpack.c.h.b16 %v113
    %v178 = vpack.c.b16 %v154, %v150
    %v179 = vpack.c.b16 %v155, %v151
    %v180 = vpack.c.b16 %v156, %v152
    %v181 = vpack.c.b16 %v157, %v153
    %v182 = vpack.c.b16 %v162, %v158
    %v183 = vpack.c.b16 %v163, %v159
    %v184 = vpack.c.b16 %v164, %v160
    %v185 = vpack.c.b16 %v165, %v161
    %v186 = vpack.c.b16 %v170, %v166
    %v187 = vpack.c.b16 %v171, %v167
    %v188 = vpack.c.b16 %v172, %v168
    %v189 = vpack.c.b16 %v173, %v169
    %v190 = vpack.c.b16 %v174, %v174
    %v191 = vpack.c.b16 %v175, %v175
    %v192 = vpack.c.b16 %v176, %v176
    %v193 = vpack.c.b16 %v177, %v177
    %vm206 = vcmask 408576
    %v208 = vsel %vm206, %v99, 0
    %vm210 = vcmask 1040384
    %v212 = vsel %vm210, %v190, 0
    %v215 = vsel %vm210, %v191, 0
    %v218 = vsel %vm210, %v192, 0
    %v221 = vsel %vm210, %v193, 0
    %223 = vmatprep.subr.bf16.mxu0 0
    %224 = vmatpush1.bf16.msra.mxu0 0
    %225 = vmatprep.subr.bf16.mxu0 0
    %226 = vmatpush1.bf16.msra.mxu0 0
    %227 = vmatprep.subr.bf16.mxu0 0
    %228 = vmatpush1.bf16.msra.mxu0 0
    %229 = vmatprep.subr.bf16.mxu0 0
    %230 = vmatpush1.bf16.msra.mxu0 0
    %231 = vmatprep.subr.bf16.mxu0 %v215
    %232 = vmatpush1.bf16.msra.mxu0 %v212
    %233 = vmatprep.subr.bf16.mxu0 %v187
    %234 = vmatpush1.bf16.msra.mxu0 %v186
    %235 = vmatprep.subr.bf16.mxu0 %v183
    %236 = vmatpush1.bf16.msra.mxu0 %v182
    %237 = vmatprep.subr.bf16.mxu0 %v179
    %238 = vmatpush1.bf16.msra.mxu0 %v178
    %239 = vmatprep.subr.bf16.mxu0 0
    %240 = vmatpush2.bf16.msra.mxu0 0
    %241 = vmatprep.subr.bf16.mxu0 0
    %242 = vmatpush2.bf16.msra.mxu0 0
    %243 = vmatprep.subr.bf16.mxu0 0
    %244 = vmatpush2.bf16.msra.mxu0 0
    %245 = vmatprep.subr.bf16.mxu0 0
    %246 = vmatpush2.bf16.msra.mxu0 0
    %247 = vmatprep.subr.bf16.mxu0 0
    %248 = vmatpush2.bf16.msra.mxu0 0
    %249 = vmatprep.subr.bf16.mxu0 0
    %250 = vmatpush2.bf16.msra.mxu0 0
    %251 = vmatprep.subr.bf16.mxu0 0
    %252 = vmatpush2.bf16.msra.mxu0 0
    %253 = vmatprep.subr.bf16.mxu0 0
    %254 = vmatpush2.bf16.msra.mxu0 0
    %255 = vmatprep.mubr.bf16.mxu0 0
    %256 = vmatmul.mubr.bf16.gmra.mxu0 %v208
    %v257 = vpop.f32.mrf.mxu0
    %v258 = vadd.f32 %v119, %v257
    %v259 = vpop.f32.mrf.mxu0
    %v260 = vadd.f32 %v123, %v259
    %v261 = vpop.f32.mrf.mxu0
    %v262 = vpop.f32.mrf.mxu0
    %263 = vdwg.mxu0
    %264 = vmatprep.subr.bf16.mxu0 0
    %265 = vmatpush1.bf16.msra.mxu0 0
    %266 = vmatprep.subr.bf16.mxu0 0
    %267 = vmatpush1.bf16.msra.mxu0 0
    %268 = vmatprep.subr.bf16.mxu0 0
    %269 = vmatpush1.bf16.msra.mxu0 0
    %270 = vmatprep.subr.bf16.mxu0 0
    %271 = vmatpush1.bf16.msra.mxu0 0
    %272 = vmatprep.subr.bf16.mxu0 %v221
    %273 = vmatpush1.bf16.msra.mxu0 %v218
    %274 = vmatprep.subr.bf16.mxu0 %v189
    %275 = vmatpush1.bf16.msra.mxu0 %v188
    %276 = vmatprep.subr.bf16.mxu0 %v185
    %277 = vmatpush1.bf16.msra.mxu0 %v184
    %278 = vmatprep.subr.bf16.mxu0 %v181
    %279 = vmatpush1.bf16.msra.mxu0 %v180
    %280 = vmatprep.subr.bf16.mxu0 0
    %281 = vmatpush2.bf16.msra.mxu0 0
    %282 = vmatprep.subr.bf16.mxu0 0
    %283 = vmatpush2.bf16.msra.mxu0 0
    %284 = vmatprep.subr.bf16.mxu0 0
    %285 = vmatpush2.bf16.msra.mxu0 0
    %286 = vmatprep.subr.bf16.mxu0 0
    %287 = vmatpush2.bf16.msra.mxu0 0
    %288 = vmatprep.subr.bf16.mxu0 0
    %289 = vmatpush2.bf16.msra.mxu0 0
    %290 = vmatprep.subr.bf16.mxu0 0
    %291 = vmatpush2.bf16.msra.mxu0 0
    %292 = vmatprep.subr.bf16.mxu0 0
    %293 = vmatpush2.bf16.msra.mxu0 0
    %294 = vmatprep.subr.bf16.mxu0 0
    %295 = vmatpush2.bf16.msra.mxu0 0
    %296 = vmatprep.mubr.bf16.mxu0 0
    %297 = vmatmul.mubr.bf16.gmra.mxu0 %v208
    %v298 = vpop.f32.mrf.mxu0
    %v299 = vadd.f32 %v127, %v298
    %v300 = vpop.f32.mrf.mxu0
    %v301 = vadd.f32 %v131, %v300
    %v302 = vpop.f32.mrf.mxu0
    %v303 = vpop.f32.mrf.mxu0
    %304 = vdwg.mxu0
    %v305 = vmax.f32 %v258, 0.0
    %v306 = vmax.f32 %v260, 0.0
    %v307 = vmax.f32 %v299, 0.0
    %v308 = vmax.f32 %v301, 0.0
    %v309 = vpack.c.bf16 %v305, %v305
    %v310 = vpack.c.bf16 %v306, %v306
    %v311 = vpack.c.bf16 %v307, %v307
    %v312 = vpack.c.bf16 %v308, %v308
    %v313 = vld [vmem:[%s5] sm:$0xf]
    %v314 = vld [vmem:[%s5 + $0x4] sm:$0xf]
    %v315 = vld [vmem:[%s5 + $0x8] sm:$0xf]
    %v316 = vld [vmem:[%s5 + $0xc] sm:$0xf]
    %v317 = vld [vmem:[%s5 + $0x10] sm:$0xf]
    %v318 = vld [vmem:[%s5 + $0x14] sm:$0xf]
    %v319 = vld [vmem:[%s5 + $0x18] sm:$0xf]
    %v320 = vld [vmem:[%s5 + $0x1c] sm:$0xf]
    %v321 = vld [vmem:[%s5 + $0x20] sm:$0xf]
    %v322 = vld [vmem:[%s5 + $0x24] sm:$0xf]
    %v323 = vld [vmem:[%s5 + $0x28] sm:$0xf]
    %v324 = vld [vmem:[%s5 + $0x2c] sm:$0xf]
    %v325 = vld [vmem:[%s5 + $0x30] sm:$0xf]
    %v326 = vld [vmem:[%s5 + $0x34] sm:$0xf]
    %v327 = vld [vmem:[%s5 + $0x38] sm:$0xf]
    %v328 = vld [vmem:[%s5 + $0x3c] sm:$0xf]
    %v329 = vld [vmem:[%s5 + $0x40] sm:$0xf]
    %v330 = vld [vmem:[%s5 + $0x44] sm:$0xf]
    %v331 = vld [vmem:[%s5 + $0x48] sm:$0xf]
    %v332 = vld [vmem:[%s5 + $0x4c] sm:$0xf]
    %v333 = vld [vmem:[%s5 + $0x50] sm:$0xf]
    %v334 = vld [vmem:[%s5 + $0x54] sm:$0xf]
    %v335 = vld [vmem:[%s5 + $0x58] sm:$0xf]
    %v336 = vld [vmem:[%s5 + $0x5c] sm:$0xf]
    %v337 = vld [vmem:[%s5 + $0x60] sm:$0xf]
    %v338 = vld [vmem:[%s5 + $0x64] sm:$0xf]
    %v339 = vld [vmem:[%s5 + $0x68] sm:$0xf]
    %v340 = vld [vmem:[%s5 + $0x6c] sm:$0xf]
    %v341 = vld [vmem:[%s5 + $0x70] sm:$0xf]
    %v342 = vld [vmem:[%s5 + $0x74] sm:$0xf]
    %v343 = vld [vmem:[%s5 + $0x78] sm:$0xf]
    %v344 = vld [vmem:[%s5 + $0x7c] sm:$0xf]
    %v345 = vld [vmem:[%s5 + $0x80] sm:$0xf]
    %v346 = vld [vmem:[%s5 + $0x84] sm:$0xf]
    %v347 = vld [vmem:[%s5 + $0x88] sm:$0xf]
    %v348 = vld [vmem:[%s5 + $0x8c] sm:$0xf]
    %v349 = vld [vmem:[%s5 + $0x90] sm:$0xf]
    %v350 = vld [vmem:[%s5 + $0x94] sm:$0xf]
    %v351 = vld [vmem:[%s5 + $0x98] sm:$0xf]
    %v352 = vld [vmem:[%s5 + $0x9c] sm:$0xf]
    %v353 = vld [vmem:[%s5 + $0xa0] sm:$0xf]
    %v354 = vld [vmem:[%s5 + $0xa4] sm:$0xf]
    %v355 = vld [vmem:[%s5 + $0xa8] sm:$0xf]
    %v356 = vld [vmem:[%s5 + $0xac] sm:$0xf]
    %v357 = vld [vmem:[%s5 + $0xb0] sm:$0xf]
    %v358 = vld [vmem:[%s5 + $0xb4] sm:$0xf]
    %v359 = vld [vmem:[%s5 + $0xb8] sm:$0xf]
    %v360 = vld [vmem:[%s5 + $0xbc] sm:$0xf]
    %v361 = vld [vmem:[%s5 + $0xc0] sm:$0xf]
    %v362 = vld [vmem:[%s5 + $0xc4] sm:$0xf]
    %v363 = vld [vmem:[%s5 + $0xc8] sm:$0xf]
    %v364 = vld [vmem:[%s5 + $0xcc] sm:$0xf]
    %v365 = vld [vmem:[%s5 + $0xd0] sm:$0xf]
    %v366 = vld [vmem:[%s5 + $0xd4] sm:$0xf]
    %v367 = vld [vmem:[%s5 + $0xd8] sm:$0xf]
    %v368 = vld [vmem:[%s5 + $0xdc] sm:$0xf]
    %v369 = vld [vmem:[%s5 + $0xe0] sm:$0xf]
    %v370 = vld [vmem:[%s5 + $0xe4] sm:$0xf]
    %v371 = vld [vmem:[%s5 + $0xe8] sm:$0xf]
    %v372 = vld [vmem:[%s5 + $0xec] sm:$0xf]
    %v373 = vld [vmem:[%s5 + $0xf0] sm:$0xf]
    %v374 = vld [vmem:[%s5 + $0xf4] sm:$0xf]
    %v375 = vld [vmem:[%s5 + $0xf8] sm:$0x3]
    %v376 = vld [vmem:[%s6] sm:$0x1]
    %v378 = vlaneseq
    %v379 = vshrl.u32 %v378, 7
    %v380 = vsub.s32 0, %v379
    %v381 = vrot.slane %v376, %v380
    %v446 = vunpack.c.l.b16 %v313
    %v447 = vunpack.c.l.b16 %v314
    %v448 = vunpack.c.l.b16 %v315
    %v449 = vunpack.c.l.b16 %v316
    %v450 = vunpack.c.l.b16 %v317
    %v451 = vunpack.c.l.b16 %v318
    %v452 = vunpack.c.l.b16 %v319
    %v453 = vunpack.c.l.b16 %v320
    %v454 = vunpack.c.l.b16 %v321
    %v455 = vunpack.c.l.b16 %v322
    %v456 = vunpack.c.l.b16 %v323
    %v457 = vunpack.c.l.b16 %v324
    %v458 = vunpack.c.l.b16 %v325
    %v459 = vunpack.c.l.b16 %v326
    %v460 = vunpack.c.l.b16 %v327
    %v461 = vunpack.c.l.b16 %v328
    %v462 = vunpack.c.l.b16 %v329
    %v463 = vunpack.c.l.b16 %v330
    %v464 = vunpack.c.l.b16 %v331
    %v465 = vunpack.c.l.b16 %v332
    %v466 = vunpack.c.l.b16 %v333
    %v467 = vunpack.c.l.b16 %v334
    %v468 = vunpack.c.l.b16 %v335
    %v469 = vunpack.c.l.b16 %v336
    %v470 = vunpack.c.l.b16 %v337
    %v471 = vunpack.c.l.b16 %v338
    %v472 = vunpack.c.l.b16 %v339
    %v473 = vunpack.c.l.b16 %v340
    %v474 = vunpack.c.l.b16 %v341
    %v475 = vunpack.c.l.b16 %v342
    %v476 = vunpack.c.l.b16 %v343
    %v477 = vunpack.c.l.b16 %v344
    %v478 = vunpack.c.l.b16 %v345
    %v479 = vunpack.c.l.b16 %v346
    %v480 = vunpack.c.l.b16 %v347
    %v481 = vunpack.c.l.b16 %v348
    %v482 = vunpack.c.l.b16 %v349
    %v483 = vunpack.c.l.b16 %v350
    %v484 = vunpack.c.l.b16 %v351
    %v485 = vunpack.c.l.b16 %v352
    %v486 = vunpack.c.l.b16 %v353
    %v487 = vunpack.c.l.b16 %v354
    %v488 = vunpack.c.l.b16 %v355
    %v489 = vunpack.c.l.b16 %v356
    %v490 = vunpack.c.l.b16 %v357
    %v491 = vunpack.c.l.b16 %v358
    %v492 = vunpack.c.l.b16 %v359
    %v493 = vunpack.c.l.b16 %v360
    %v494 = vunpack.c.l.b16 %v361
    %v495 = vunpack.c.l.b16 %v362
    %v496 = vunpack.c.l.b16 %v363
    %v497 = vunpack.c.l.b16 %v364
    %v498 = vunpack.c.l.b16 %v365
    %v499 = vunpack.c.l.b16 %v366
    %v500 = vunpack.c.l.b16 %v367
    %v501 = vunpack.c.l.b16 %v368
    %v502 = vunpack.c.l.b16 %v369
    %v503 = vunpack.c.l.b16 %v370
    %v504 = vunpack.c.l.b16 %v371
    %v505 = vunpack.c.l.b16 %v372
    %v506 = vunpack.c.l.b16 %v373
    %v507 = vunpack.c.l.b16 %v374
    %v508 = vunpack.c.l.b16 %v375
    %v509 = vpack.c.b16 %v447, %v446
    %v510 = vpack.c.b16 %v449, %v448
    %v511 = vpack.c.b16 %v451, %v450
    %v512 = vpack.c.b16 %v453, %v452
    %v513 = vpack.c.b16 %v455, %v454
    %v514 = vpack.c.b16 %v457, %v456
    %v515 = vpack.c.b16 %v459, %v458
    %v516 = vpack.c.b16 %v461, %v460
    %v517 = vpack.c.b16 %v463, %v462
    %v518 = vpack.c.b16 %v465, %v464
    %v519 = vpack.c.b16 %v467, %v466
    %v520 = vpack.c.b16 %v469, %v468
    %v521 = vpack.c.b16 %v471, %v470
    %v522 = vpack.c.b16 %v473, %v472
    %v523 = vpack.c.b16 %v475, %v474
    %v524 = vpack.c.b16 %v477, %v476
    %v525 = vpack.c.b16 %v479, %v478
    %v526 = vpack.c.b16 %v481, %v480
    %v527 = vpack.c.b16 %v483, %v482
    %v528 = vpack.c.b16 %v485, %v484
    %v529 = vpack.c.b16 %v487, %v486
    %v530 = vpack.c.b16 %v489, %v488
    %v531 = vpack.c.b16 %v491, %v490
    %v532 = vpack.c.b16 %v493, %v492
    %v533 = vpack.c.b16 %v495, %v494
    %v534 = vpack.c.b16 %v497, %v496
    %v535 = vpack.c.b16 %v499, %v498
    %v536 = vpack.c.b16 %v501, %v500
    %v537 = vpack.c.b16 %v503, %v502
    %v538 = vpack.c.b16 %v505, %v504
    %v539 = vpack.c.b16 %v507, %v506
    %v540 = vpack.c.b16 %v508, %v508
    %vm572 = vcmask 949248
    %v574 = vsel %vm572, %v312, 0
    %vm576 = vcmask 1041408
    %v578 = vsel %vm576, %v540, 0
    %580 = vmatprep.subr.bf16.mxu0 0
    %581 = vmatpush1.bf16.msra.mxu0 %v516
    %582 = vmatprep.subr.bf16.mxu0 0
    %583 = vmatpush1.bf16.msra.mxu0 %v515
    %584 = vmatprep.subr.bf16.mxu0 0
    %585 = vmatpush1.bf16.msra.mxu0 %v514
    %586 = vmatprep.subr.bf16.mxu0 0
    %587 = vmatpush1.bf16.msra.mxu0 %v513
    %588 = vmatprep.subr.bf16.mxu0 0
    %589 = vmatpush1.bf16.msra.mxu0 %v512
    %590 = vmatprep.subr.bf16.mxu0 0
    %591 = vmatpush1.bf16.msra.mxu0 %v511
    %592 = vmatprep.subr.bf16.mxu0 0
    %593 = vmatpush1.bf16.msra.mxu0 %v510
    %594 = vmatprep.subr.bf16.mxu0 0
    %595 = vmatpush1.bf16.msra.mxu0 %v509
    %596 = vmatprep.subr.bf16.mxu0 0
    %597 = vmatpush2.bf16.msra.mxu0 %v524
    %598 = vmatprep.subr.bf16.mxu0 0
    %599 = vmatpush2.bf16.msra.mxu0 %v523
    %600 = vmatprep.subr.bf16.mxu0 0
    %601 = vmatpush2.bf16.msra.mxu0 %v522
    %602 = vmatprep.subr.bf16.mxu0 0
    %603 = vmatpush2.bf16.msra.mxu0 %v521
    %604 = vmatprep.subr.bf16.mxu0 0
    %605 = vmatpush2.bf16.msra.mxu0 %v520
    %606 = vmatprep.subr.bf16.mxu0 0
    %607 = vmatpush2.bf16.msra.mxu0 %v519
    %608 = vmatprep.subr.bf16.mxu0 0
    %609 = vmatpush2.bf16.msra.mxu0 %v518
    %610 = vmatprep.subr.bf16.mxu0 0
    %611 = vmatpush2.bf16.msra.mxu0 %v517
    %612 = vmatprep.mubr.bf16.mxu0 %v310
    %613 = vmatmul.mubr.bf16.gmra.mxu0 %v309
    %v614 = vpop.f32.mrf.mxu0
    %v615 = vadd.f32 %v381, %v614
    %v616 = vpop.f32.mrf.mxu0
    %v617 = vpop.f32.mrf.mxu0
    %v618 = vpop.f32.mrf.mxu0
    %619 = vdwg.mxu0
    %620 = vmatprep.subr.bf16.mxu0 0
    %621 = vmatpush1.bf16.msra.mxu0 %v532
    %622 = vmatprep.subr.bf16.mxu0 0
    %623 = vmatpush1.bf16.msra.mxu0 %v531
    %624 = vmatprep.subr.bf16.mxu0 0
    %625 = vmatpush1.bf16.msra.mxu0 %v530
    %626 = vmatprep.subr.bf16.mxu0 0
    %627 = vmatpush1.bf16.msra.mxu0 %v529
    %628 = vmatprep.subr.bf16.mxu0 0
    %629 = vmatpush1.bf16.msra.mxu0 %v528
    %630 = vmatprep.subr.bf16.mxu0 0
    %631 = vmatpush1.bf16.msra.mxu0 %v527
    %632 = vmatprep.subr.bf16.mxu0 0
    %633 = vmatpush1.bf16.msra.mxu0 %v526
    %634 = vmatprep.subr.bf16.mxu0 0
    %635 = vmatpush1.bf16.msra.mxu0 %v525
    %636 = vmatprep.subr.bf16.mxu0 0
    %637 = vmatpush2.bf16.msra.mxu0 %v578
    %638 = vmatprep.subr.bf16.mxu0 0
    %639 = vmatpush2.bf16.msra.mxu0 %v539
    %640 = vmatprep.subr.bf16.mxu0 0
    %641 = vmatpush2.bf16.msra.mxu0 %v538
    %642 = vmatprep.subr.bf16.mxu0 0
    %643 = vmatpush2.bf16.msra.mxu0 %v537
    %644 = vmatprep.subr.bf16.mxu0 0
    %645 = vmatpush2.bf16.msra.mxu0 %v536
    %646 = vmatprep.subr.bf16.mxu0 0
    %647 = vmatpush2.bf16.msra.mxu0 %v535
    %648 = vmatprep.subr.bf16.mxu0 0
    %649 = vmatpush2.bf16.msra.mxu0 %v534
    %650 = vmatprep.subr.bf16.mxu0 0
    %651 = vmatpush2.bf16.msra.mxu0 %v533
    %652 = vmatprep.mubr.bf16.mxu0 %v574
    %653 = vmatmul.mubr.bf16.gmra.mxu0 %v311
    %v654 = vpop.f32.mrf.mxu0
    %v655 = vadd.f32 %v615, %v654
    %v656 = vpop.f32.mrf.mxu0
    %v657 = vpop.f32.mrf.mxu0
    %v658 = vpop.f32.mrf.mxu0
    %659 = vdwg.mxu0
    %v660 = vmax.f32 %v655, 0.0
    %v661 = vpack.c.bf16 %v660, %v660
    %v662 = vld [vmem:[%s7] sm:$0xf]
    %v663 = vld [vmem:[%s7 + $0x4] sm:$0xf]
    %v664 = vld [vmem:[%s7 + $0x8] sm:$0xf]
    %v665 = vld [vmem:[%s7 + $0xc] sm:$0xf]
    %v666 = vld [vmem:[%s7 + $0x10] sm:$0xf]
    %v667 = vld [vmem:[%s7 + $0x14] sm:$0xf]
    %v668 = vld [vmem:[%s7 + $0x18] sm:$0xf]
    %v669 = vld [vmem:[%s7 + $0x1c] sm:$0xf]
    %v670 = vld [vmem:[%s7 + $0x20] sm:$0xf]
    %v671 = vld [vmem:[%s7 + $0x24] sm:$0xf]
    %v672 = vld [vmem:[%s7 + $0x28] sm:$0xf]
    %v673 = vld [vmem:[%s7 + $0x2c] sm:$0x1]
    %v674 = vld [vmem:[%s8] sm:$0x1]
    %v676 = vlaneseq
    %v677 = vshrl.u32 %v676, 7
    %v678 = vsub.s32 0, %v677
    %v679 = vrot.slane %v674, %v678
    %v693 = vunpack.c.l.b16 %v662
    %v694 = vunpack.c.l.b16 %v663
    %v695 = vunpack.c.l.b16 %v664
    %v696 = vunpack.c.l.b16 %v665
    %v697 = vunpack.c.l.b16 %v666
    %v698 = vunpack.c.l.b16 %v667
    %v699 = vunpack.c.l.b16 %v668
    %v700 = vunpack.c.l.b16 %v669
    %v701 = vunpack.c.l.b16 %v670
    %v702 = vunpack.c.l.b16 %v671
    %v703 = vunpack.c.l.b16 %v672
    %v704 = vunpack.c.l.b16 %v673
    %v705 = vpack.c.b16 %v694, %v693
    %v706 = vpack.c.b16 %v696, %v695
    %v707 = vpack.c.b16 %v698, %v697
    %v708 = vpack.c.b16 %v700, %v699
    %v709 = vpack.c.b16 %v702, %v701
    %v710 = vpack.c.b16 %v704, %v703
    %vm716 = vcmask 736256
    %v718 = vsel %vm716, %v661, 0
    %v721 = vsel %vm54, %v710, 0
    %723 = vmatprep.subr.bf16.mxu0 0
    %724 = vmatpush1.bf16.msra.mxu0 0
    %725 = vmatprep.subr.bf16.mxu0 0
    %726 = vmatpush1.bf16.msra.mxu0 0
    %727 = vmatprep.subr.bf16.mxu0 0
    %728 = vmatpush1.bf16.msra.mxu0 %v721
    %729 = vmatprep.subr.bf16.mxu0 0
    %730 = vmatpush1.bf16.msra.mxu0 %v709
    %731 = vmatprep.subr.bf16.mxu0 0
    %732 = vmatpush1.bf16.msra.mxu0 %v708
    %733 = vmatprep.subr.bf16.mxu0 0
    %734 = vmatpush1.bf16.msra.mxu0 %v707
    %735 = vmatprep.subr.bf16.mxu0 0
    %736 = vmatpush1.bf16.msra.mxu0 %v706
    %737 = vmatprep.subr.bf16.mxu0 0
    %738 = vmatpush1.bf16.msra.mxu0 %v705
    %739 = vmatprep.subr.bf16.mxu0 0
    %740 = vmatpush2.bf16.msra.mxu0 0
    %741 = vmatprep.subr.bf16.mxu0 0
    %742 = vmatpush2.bf16.msra.mxu0 0
    %743 = vmatprep.subr.bf16.mxu0 0
    %744 = vmatpush2.bf16.msra.mxu0 0
    %745 = vmatprep.subr.bf16.mxu0 0
    %746 = vmatpush2.bf16.msra.mxu0 0
    %747 = vmatprep.subr.bf16.mxu0 0
    %748 = vmatpush2.bf16.msra.mxu0 0
    %749 = vmatprep.subr.bf16.mxu0 0
    %750 = vmatpush2.bf16.msra.mxu0 0
    %751 = vmatprep.subr.bf16.mxu0 0
    %752 = vmatpush2.bf16.msra.mxu0 0
    %753 = vmatprep.subr.bf16.mxu0 0
    %754 = vmatpush2.bf16.msra.mxu0 0
    %755 = vmatprep.mubr.bf16.mxu0 0
    %756 = vmatmul.mubr.bf16.gmra.mxu0 %v718
    %v757 = vpop.f32.mrf.mxu0
    %v758 = vadd.f32 %v679, %v757
    %v759 = vpop.f32.mrf.mxu0
    %v760 = vpop.f32.mrf.mxu0
    %v761 = vpop.f32.mrf.mxu0
    %762 = vdwg.mxu0
    %vm763 = vcmask 72704
    %764 = vst.msk [vmem:[#allocation2] sm:$0xff] %vm763, %v758
    // Predicated region
    $region38: #{tpu_custom_call.1} parent=1 // pred_check
      _
    $region39: #{tpu_custom_call.1} parent=1 // pred_check_branch
      %766 = sbr.rel (0) target = $region41
    $region40: #{tpu_custom_call.1} parent=1 // pred_region
      %s768 = ssub.s32 128, 128
      %769 = vsyncadd [#allocation3], %s768
      %s771 = sshll.u32 [#allocation2], 4
      %s772 = int_to_ptr.vmem [resolvable:$true] %s771
      %774 = dma.vmem_to_hbm [thread:$0]  %s772, 128, %s9, [#allocation3]
    $region41: #{tpu_custom_call.1} parent=1 // pred_fallthru
      _
    // Predicated region
    $region42: #{tpu_custom_call.1} parent=1 // pred_check
      _
    $region43: #{tpu_custom_call.1} parent=1 // pred_check_branch
      %776 = sbr.rel (0) target = $region45
    $region44: #{tpu_custom_call.1} parent=1 // pred_region
      %777 = dma.done [#allocation3], 128
    $region45: #{tpu_custom_call.1} parent=1 // pred_fallthru
      _
    %778 = vsyncpa [#allocation3], 1

</llo_original>
